<compile_context>
chip_gen: v7x
topology: tpu7x:2x2x1
jax: 0.10.0
libtpu: 0.0.40
codegen_flags: <defaults>
</compile_context>

<pallas_src>
import jax
import jax.numpy as jnp
import numpy as np
from jax.experimental import pallas as pl
from jax.experimental.pallas import tpu as pltpu

IN_FEATURES = 5
OUT_FEATURES = 2
TILE_M = 512  # row tile used only when M is large and divisible


def _linear_add_kernel(x_ref, p_ref, o_ref):
    # x_ref: (M, IN) f32
    # p_ref: (8, 128) f32 packed params:
    #        row k (k < IN), lanes [0:OUT] = weight[:, k]   (i.e. W^T row k)
    #        row IN,         lanes [0:OUT] = bias + other
    # o_ref: (M, OUT) f32
    x = x_ref[...]

    # Start from the (bias + other) row; broadcasts over M via the adds below.
    acc = p_ref[IN_FEATURES:IN_FEATURES + 1, :]            # (1, 128)

    # Unrolled K contraction on the VPU — no vmatmul, no MXU drain latency.
    for k in range(IN_FEATURES):
        acc = acc + x[:, k:k + 1] * p_ref[k:k + 1, :]      # (M,1)*(1,128) -> (M,128)

    o_ref[...] = acc[:, :OUT_FEATURES].astype(o_ref.dtype)


def pack_params(weight, bias, other):
    """Pack PyTorch-layout weight (OUT, IN), bias (OUT,), and scalar `other`
    into a single (8, 128) f32 VMEM-aligned slab.  Call ONCE outside the hot
    path (the transpose and the `+ other` fold happen here, not per call)."""
    w = jnp.asarray(weight, jnp.float32)
    b = jnp.asarray(bias, jnp.float32)
    p = jnp.zeros((8, 128), jnp.float32)
    p = p.at[:IN_FEATURES, :OUT_FEATURES].set(w.T)                     # W^T rows
    p = p.at[IN_FEATURES, :OUT_FEATURES].set(b + jnp.float32(other))   # bias+other
    return p


def linear_add(x1, packed_params):
    """y = x1 @ W.T + bias + other, with (W, bias, other) pre-packed by pack_params."""
    orig_shape = x1.shape
    if x1.dtype != jnp.float32:
        x1 = x1.astype(jnp.float32)
    m = int(np.prod(orig_shape[:-1]))
    x2d = x1.reshape(m, IN_FEATURES)  # metadata-only reshape

    if m >= TILE_M and m % TILE_M == 0:
        # Batched path: 1-D grid over M, weight slab resident, grid axis parallel
        # (lets v7x shard the row tiles across its two TensorCores).
        out = pl.pallas_call(
            _linear_add_kernel,
            out_shape=jax.ShapeDtypeStruct((m, OUT_FEATURES), jnp.float32),
            grid=(m // TILE_M,),
            in_specs=[
                pl.BlockSpec((TILE_M, IN_FEATURES), lambda i: (i, 0)),
                pl.BlockSpec((8, 128), lambda i: (0, 0)),
            ],
            out_specs=pl.BlockSpec((TILE_M, OUT_FEATURES), lambda i: (i, 0)),
            compiler_params=pltpu.CompilerParams(
                dimension_semantics=("parallel",)),
        )(x2d, packed_params)
    else:
        # Tiny-M path (the module's actual shape, M = 1): gridless, 2 DMAs total.
        out = pl.pallas_call(
            _linear_add_kernel,
            out_shape=jax.ShapeDtypeStruct((m, OUT_FEATURES), jnp.float32),
            in_specs=[
                pl.BlockSpec(memory_space=pltpu.MemorySpace.VMEM),
                pl.BlockSpec(memory_space=pltpu.MemorySpace.VMEM),
            ],
            out_specs=pl.BlockSpec(memory_space=pltpu.MemorySpace.VMEM),
        )(x2d, packed_params)

    return out.reshape(orig_shape[:-1] + (OUT_FEATURES,))


if __name__ == "__main__":
    key = jax.random.PRNGKey(0)
    kx, kw, kb, kbig = jax.random.split(key, 4)

    # Input: (1, 1, 5) — same as the PyTorch module's x1 = torch.randn(1, 1, 5)
    x1 = jax.random.normal(kx, (1, 1, IN_FEATURES), dtype=jnp.float32)

    # Deterministic parameters for Linear(5, 2), PyTorch layout: weight (OUT, IN)
    bound = 1.0 / np.sqrt(IN_FEATURES)
    weight = jax.random.uniform(
        kw, (OUT_FEATURES, IN_FEATURES), minval=-bound, maxval=bound,
        dtype=jnp.float32)
    bias = jax.random.uniform(
        kb, (OUT_FEATURES,), minval=-bound, maxval=bound, dtype=jnp.float32)

    other = 1.0  # self._other in the module (scalar)

    # Pack once, outside the hot path.
    packed = pack_params(weight, bias, other)
    jax.block_until_ready(packed)

    # --- module-shaped call (M = 1, gridless path) ---
    y = linear_add(x1, packed)
    jax.block_until_ready(y)
    ref = x1 @ weight.T + bias + other
    np.testing.assert_allclose(np.asarray(y), np.asarray(ref), rtol=1e-5, atol=1e-5)

    # --- batched call exercising the M-tiled "parallel" grid path ---
    xb = jax.random.normal(kbig, (8, 128, IN_FEATURES), dtype=jnp.float32)  # M = 1024
    yb = linear_add(xb, packed)
    jax.block_until_ready(yb)
    ref_b = xb @ weight.T + bias + other
    np.testing.assert_allclose(np.asarray(yb), np.asarray(ref_b), rtol=1e-5, atol=1e-5)

    print("KERNEL_OK")
</pallas_src>

<mosaic_0001>
module attributes {stable_mosaic.version = 11 : i64} {
  func.func @_linear_add_kernel(%arg0: memref<1x5xf32, #tpu.memory_space<vmem>>, %arg1: memref<8x128xf32, #tpu.memory_space<vmem>>, %arg2: memref<1x2xf32, #tpu.memory_space<vmem>>) attributes {dimension_semantics = [], scalar_prefetch = 0 : i64, scratch_operands = 0 : i64, tpu.core_type = #tpu.core_type<tc>} {
    %c0 = arith.constant 0 : index
    %c0_0 = arith.constant 0 : index
    %0 = vector.load %arg0[%c0, %c0_0] : memref<1x5xf32, #tpu.memory_space<vmem>>, vector<1x5xf32>
    %c5 = arith.constant 5 : index
    %c0_1 = arith.constant 0 : index
    %1 = vector.load %arg1[%c5, %c0_1] : memref<8x128xf32, #tpu.memory_space<vmem>>, vector<1x128xf32>
    %2 = vector.extract_strided_slice %0 {offsets = [0, 0], sizes = [1, 1], strides = [1, 1]} : vector<1x5xf32> to vector<1x1xf32>
    %c0_2 = arith.constant 0 : index
    %c0_3 = arith.constant 0 : index
    %3 = vector.load %arg1[%c0_2, %c0_3] : memref<8x128xf32, #tpu.memory_space<vmem>>, vector<1x128xf32>
    %4 = vector.broadcast %2 : vector<1x1xf32> to vector<1x128xf32>
    %5 = arith.mulf %4, %3 : vector<1x128xf32>
    %6 = arith.addf %1, %5 : vector<1x128xf32>
    %7 = vector.extract_strided_slice %0 {offsets = [0, 1], sizes = [1, 1], strides = [1, 1]} : vector<1x5xf32> to vector<1x1xf32>
    %c1 = arith.constant 1 : index
    %c0_4 = arith.constant 0 : index
    %8 = vector.load %arg1[%c1, %c0_4] : memref<8x128xf32, #tpu.memory_space<vmem>>, vector<1x128xf32>
    %9 = vector.broadcast %7 : vector<1x1xf32> to vector<1x128xf32>
    %10 = arith.mulf %9, %8 : vector<1x128xf32>
    %11 = arith.addf %6, %10 : vector<1x128xf32>
    %12 = vector.extract_strided_slice %0 {offsets = [0, 2], sizes = [1, 1], strides = [1, 1]} : vector<1x5xf32> to vector<1x1xf32>
    %c2 = arith.constant 2 : index
    %c0_5 = arith.constant 0 : index
    %13 = vector.load %arg1[%c2, %c0_5] : memref<8x128xf32, #tpu.memory_space<vmem>>, vector<1x128xf32>
    %14 = vector.broadcast %12 : vector<1x1xf32> to vector<1x128xf32>
    %15 = arith.mulf %14, %13 : vector<1x128xf32>
    %16 = arith.addf %11, %15 : vector<1x128xf32>
    %17 = vector.extract_strided_slice %0 {offsets = [0, 3], sizes = [1, 1], strides = [1, 1]} : vector<1x5xf32> to vector<1x1xf32>
    %c3 = arith.constant 3 : index
    %c0_6 = arith.constant 0 : index
    %18 = vector.load %arg1[%c3, %c0_6] : memref<8x128xf32, #tpu.memory_space<vmem>>, vector<1x128xf32>
    %19 = vector.broadcast %17 : vector<1x1xf32> to vector<1x128xf32>
    %20 = arith.mulf %19, %18 : vector<1x128xf32>
    %21 = arith.addf %16, %20 : vector<1x128xf32>
    %22 = vector.extract_strided_slice %0 {offsets = [0, 4], sizes = [1, 1], strides = [1, 1]} : vector<1x5xf32> to vector<1x1xf32>
    %c4 = arith.constant 4 : index
    %c0_7 = arith.constant 0 : index
    %23 = vector.load %arg1[%c4, %c0_7] : memref<8x128xf32, #tpu.memory_space<vmem>>, vector<1x128xf32>
    %24 = vector.broadcast %22 : vector<1x1xf32> to vector<1x128xf32>
    %25 = arith.mulf %24, %23 : vector<1x128xf32>
    %26 = arith.addf %21, %25 : vector<1x128xf32>
    %27 = vector.extract_strided_slice %26 {offsets = [0, 0], sizes = [1, 2], strides = [1, 1]} : vector<1x128xf32> to vector<1x2xf32>
    %c0_8 = arith.constant 0 : index
    %c0_9 = arith.constant 0 : index
    %28 = vector.load %arg2[%c0_8, %c0_9] : memref<1x2xf32, #tpu.memory_space<vmem>>, vector<1x2xf32>
    tpu.vector_store %arg2[%c0_8, %c0_9], %27 {strides = array<i32>} : memref<1x2xf32, #tpu.memory_space<vmem>>, vector<1x2xf32>,
    return
  }
}

</mosaic_0001>

<llo_original>
// kernel: tpu_custom_call.1
$region0: #{tpu_custom_call.1}
  #allocation0 [shape = 'u32[]', space=smem, size = 0x4, offset = 0x4, fixed_abs, tag = 'smem constant byte address 0x4 - core index']
  #allocation1 [shape = 'u32[144,128]{1,0:T(1,128)}', space=vmem, size = 0x12000, scoped, tag = 'internal scratch']
  %s0 = inlined_call_operand.hbm [shape: f32[1,5], index: 0, kind: input, shape index: {}]
  %s1 = inlined_call_operand.hbm [shape: f32[8,128], index: 1, kind: input, shape index: {}]
  %s2 = inlined_call_operand.hbm [shape: f32[1,2], index: 2, kind: output, shape index: {}]
  %s3 = sld [smem:[#allocation0]]
  $region26: #{tpu_custom_call.1} parent=0
    _
  %s5 = ssub.s32 1, %s3
  %s6 = scalar_select 0, %s5, %s3
  $region1: #{tpu_custom_call.1} parent=0
    #allocation2 [shape = 'u8[512]{0}', space=vmem, size = 0x400, scoped, tag = 'input window, operand 0, single buffered']
    #allocation3 [shape = 's32[1]{0}', space=sflag, size = 0x4, scoped, tag = 'scoped memory for tpu_custom_call.1']
    #allocation4 [shape = 's32[1]{0}', space=sflag, size = 0x4, scoped, tag = 'scoped memory for tpu_custom_call.1']
    #allocation5 [shape = 'u8[4096]{0}', space=vmem, size = 0x1000, scoped, tag = 'input window, operand 1, single buffered']
    #allocation6 [shape = 's32[1]{0}', space=sflag, size = 0x4, scoped, tag = 'scoped memory for tpu_custom_call.1']
    #allocation7 [shape = 'u8[512]{0}', space=vmem, size = 0x400, scoped, tag = 'output window, operand 0, single buffered']
    %7 = vsyncpa [#allocation3], 0
    %8 = vsyncpa [#allocation6], 0
    %9 = vsyncpa [#allocation4], 0
    // Predicated region
    $region2: #{tpu_custom_call.1} parent=1 // pred_check
      _
    $region3: #{tpu_custom_call.1} parent=1 // pred_check_branch
      %11 = sbr.rel (0) target = $region5
    $region4: #{tpu_custom_call.1} parent=1 // pred_region
      %s13 = ssub.s32 16, 16
      %14 = vsyncadd [#allocation3], %s13
      %s16 = sshll.u32 [#allocation2], 4
      %s17 = int_to_ptr.vmem [resolvable:$true] %s16
      %19 = dma.hbm_to_vmem [thread:$0]  %s0, 16, %s17, [#allocation3]
    $region5: #{tpu_custom_call.1} parent=1 // pred_fallthru
      _
    // Predicated region
    $region6: #{tpu_custom_call.1} parent=1 // pred_check
      _
    $region7: #{tpu_custom_call.1} parent=1 // pred_check_branch
      %21 = sbr.rel (0) target = $region9
    $region8: #{tpu_custom_call.1} parent=1 // pred_region
      %s23 = ssub.s32 128, 128
      %24 = vsyncadd [#allocation6], %s23
      %s26 = sshll.u32 [#allocation5], 4
      %s27 = int_to_ptr.vmem [resolvable:$true] %s26
      %29 = dma.hbm_to_vmem [thread:$0]  %s1, 128, %s27, [#allocation6]
    $region9: #{tpu_custom_call.1} parent=1 // pred_fallthru
      _
    // Predicated region
    $region10: #{tpu_custom_call.1} parent=1 // pred_check
      _
    $region11: #{tpu_custom_call.1} parent=1 // pred_check_branch
      %31 = sbr.rel (0) target = $region13
    $region12: #{tpu_custom_call.1} parent=1 // pred_region
      %32 = dma.done [#allocation3], 16
    $region13: #{tpu_custom_call.1} parent=1 // pred_fallthru
      _
    // Predicated region
    $region14: #{tpu_custom_call.1} parent=1 // pred_check
      _
    $region15: #{tpu_custom_call.1} parent=1 // pred_check_branch
      %34 = sbr.rel (0) target = $region17
    $region16: #{tpu_custom_call.1} parent=1 // pred_region
      %35 = dma.done [#allocation6], 128
    $region17: #{tpu_custom_call.1} parent=1 // pred_fallthru
      _
    %v36 = vld [vmem:[#allocation2] sm:$0x1]
    %v37 = vld [vmem:[#allocation5 + $0x5] sm:$0x1]
    %v38 = vld [vmem:[#allocation5] sm:$0x1]
    %40 = vset.pattern.permute.xlu0 0
    %41 = vperm.xlu0 %40, %v36
    %v42 = vpop.permute.xlu0 %41
    %v44 = vlaneseq
    %v45 = vshrl.u32 %v44, 7
    %v46 = vsub.s32 0, %v45
    %v47 = vrot.slane %v42, %v46
    %v48 = vmul.f32 %v47, %v38
    %v49 = vadd.f32 %v37, %v48
    %v50 = vld [vmem:[#allocation5 + $0x1] sm:$0x1]
    %51 = vset.pattern.permute.xlu0 1
    %52 = vperm.xlu0 %51, %v36
    %v53 = vpop.permute.xlu0 %52
    %v55 = vlaneseq
    %v56 = vshrl.u32 %v55, 7
    %v57 = vsub.s32 0, %v56
    %v58 = vrot.slane %v53, %v57
    %v59 = vmul.f32 %v58, %v50
    %v60 = vadd.f32 %v49, %v59
    %v61 = vld [vmem:[#allocation5 + $0x2] sm:$0x1]
    %62 = vset.pattern.permute.xlu0 2
    %63 = vperm.xlu0 %62, %v36
    %v64 = vpop.permute.xlu0 %63
    %v66 = vlaneseq
    %v67 = vshrl.u32 %v66, 7
    %v68 = vsub.s32 0, %v67
    %v69 = vrot.slane %v64, %v68
    %v70 = vmul.f32 %v69, %v61
    %v71 = vadd.f32 %v60, %v70
    %v72 = vld [vmem:[#allocation5 + $0x3] sm:$0x1]
    %73 = vset.pattern.permute.xlu0 3
    %74 = vperm.xlu0 %73, %v36
    %v75 = vpop.permute.xlu0 %74
    %v77 = vlaneseq
    %v78 = vshrl.u32 %v77, 7
    %v79 = vsub.s32 0, %v78
    %v80 = vrot.slane %v75, %v79
    %v81 = vmul.f32 %v80, %v72
    %v82 = vadd.f32 %v71, %v81
    %v83 = vld [vmem:[#allocation5 + $0x4] sm:$0x1]
    %84 = vset.pattern.permute.xlu0 4
    %85 = vperm.xlu0 %84, %v36
    %v86 = vpop.permute.xlu0 %85
    %v88 = vlaneseq
    %v89 = vshrl.u32 %v88, 7
    %v90 = vsub.s32 0, %v89
    %v91 = vrot.slane %v86, %v90
    %v92 = vmul.f32 %v91, %v83
    %v93 = vadd.f32 %v82, %v92
    %vm94 = vcmask 8192
    %95 = vst.msk [vmem:[#allocation7] sm:$0x1] %vm94, %v93
    // Predicated region
    $region18: #{tpu_custom_call.1} parent=1 // pred_check
      _
    $region19: #{tpu_custom_call.1} parent=1 // pred_check_branch
      %97 = sbr.rel (0) target = $region21
    $region20: #{tpu_custom_call.1} parent=1 // pred_region
      %s99 = ssub.s32 16, 16
      %100 = vsyncadd [#allocation4], %s99
      %s102 = sshll.u32 [#allocation7], 4
      %s103 = int_to_ptr.vmem [resolvable:$true] %s102
      %105 = dma.vmem_to_hbm [thread:$0]  %s103, 16, %s2, [#allocation4]
    $region21: #{tpu_custom_call.1} parent=1 // pred_fallthru
      _
    // Predicated region
    $region22: #{tpu_custom_call.1} parent=1 // pred_check
      _
    $region23: #{tpu_custom_call.1} parent=1 // pred_check_branch
      %107 = sbr.rel (0) target = $region25
    $region24: #{tpu_custom_call.1} parent=1 // pred_region
      %108 = dma.done [#allocation4], 16
    $region25: #{tpu_custom_call.1} parent=1 // pred_fallthru
      _
    %109 = vsyncpa [#allocation3], 1
    %110 = vsyncpa [#allocation6], 1
    %111 = vsyncpa [#allocation4], 1

</llo_original>
